<compile_context>
chip_gen: v6e
topology: v6e:2x2x1
jax: 0.10.0
libtpu: 0.0.40
codegen_flags: <defaults>
</compile_context>

<pallas_src>
import functools

import jax
import jax.numpy as jnp
from jax import lax
from jax.experimental import pallas as pl
from jax.experimental.pallas import tpu as pltpu


def _round_up(x, m):
    return (x + m - 1) // m * m


def _convblock_kernel(x_ref, w_ref, e_ref, o_ref, acc_ref, *,
                      base_offsets, p_block, use_instance_norm, eps, neg_slope,
                      inv_count):
    # x_ref:   (1, L_pad, Ce)   bf16 flattened padded image (resident per batch element)
    # w_ref:   (Kq, Ce, C_pad)  bf16 per-kernel-position weights (resident, Buffered(1))
    # e_ref:   (P_pad, 1) f32 valid-row mask   (instance-norm path)
    #          (1, C_pad) f32 conv bias        (no-instance-norm path)
    # o_ref:   (1, P_pad, C_pad) bf16 output
    # acc_ref: (P_pad, C_pad)   f32  accumulator scratch
    for q, base in enumerate(base_offsets):
        lhs = x_ref[0, pl.ds(base, p_block), :]            # static shifted window
        part = jnp.dot(lhs, w_ref[q], preferred_element_type=jnp.float32)
        if q == 0:
            acc_ref[...] = part
        else:
            acc_ref[...] += part

    y = acc_ref[...]                                       # (P_pad, C_pad) f32
    if use_instance_norm:
        # Masked single-pass stats (E[x^2] - mean^2, clamped >= 0): garbage / padded
        # rows carry mask 0 and never contribute.  Two-pass stats would be tighter but
        # the bf16-operand tolerance dominates.
        m = e_ref[...]                                     # (P_pad, 1)
        ym = y * m
        mean = jnp.sum(ym, axis=0, keepdims=True) * inv_count       # (1, C_pad)
        ex2 = jnp.sum(ym * y, axis=0, keepdims=True) * inv_count    # (1, C_pad)
        var = jnp.maximum(ex2 - mean * mean, 0.0)
        y = (y - mean) * lax.rsqrt(var + eps)
    else:
        y = y + e_ref[...]
    o_ref[0] = jnp.where(y >= 0, y, neg_slope * y).astype(o_ref.dtype)


@functools.partial(jax.jit, static_argnames=("use_instance_norm", "stride"))
def conv_block_forward(x, weight, bias, *, use_instance_norm=True, stride=None):
    """x: (N, Cin, H, W) NCHW f32. weight: (Cout, Cin, 4, 4). bias: (Cout,). Returns NCHW."""
    N, Cin, H, W = x.shape
    Cout, Cin_w, KH, KW = weight.shape
    assert (KH, KW) == (4, 4) and Cin_w == Cin
    if stride is None:
        # Mirrors the PyTorch module (stride 2 unless out_channels == 512); pass
        # `stride=` explicitly for any other configuration.
        stride = 1 if Cout == 512 else 2

    Hp, Wp = H + 2, W + 2
    Ho = (Hp - KH) // stride + 1
    Wo = (Wp - KW) // stride + 1

    # ---- ~1x-sized bf16 relayout (no im2col) ----------------------------------------
    xb = x.astype(jnp.bfloat16)
    xp = jnp.pad(xb, ((0, 0), (0, 0), (1, 1), (1, 1)), mode="reflect")
    xp = xp.transpose(0, 2, 3, 1)                                  # NHWC (N, Hp, Wp, Cin)

    if stride == 2:
        # Space-to-depth by 2: 4x4/stride-2 conv == 2x2/stride-1 conv over 4*Cin chans.
        Hpe, Wpe = Hp + (Hp % 2), Wp + (Wp % 2)
        xp = jnp.pad(xp, ((0, 0), (0, Hpe - Hp), (0, Wpe - Wp), (0, 0)))
        He, We, Ce = Hpe // 2, Wpe // 2, 4 * Cin
        xe = xp.reshape(N, He, 2, We, 2, Cin).transpose(0, 1, 3, 2, 4, 5)
        xe = xe.reshape(N, He, We, Ce)
        Kh, Kw = 2, 2
        # Wq[a*2+b, (dy*2+dx)*Cin + c, co] = weight[co, c, 2a+dy, 2b+dx]
        wq = weight.reshape(Cout, Cin, 2, 2, 2, 2).transpose(2, 4, 3, 5, 1, 0)
        wq = wq.reshape(Kh * Kw, Ce, Cout)
    else:
        He, We, Ce = Hp, Wp, Cin
        xe = xp
        Kh, Kw = KH, KW
        wq = weight.transpose(2, 3, 1, 0).reshape(Kh * Kw, Ce, Cout)

    Kq = Kh * Kw
    base_offsets = tuple(a * We + b for a in range(Kh) for b in range(Kw))

    # Flattened-window formulation: accumulator row p == output position (p//We, p%We);
    # columns p % We >= Wo are wrap-around garbage (masked from stats, sliced off below).
    Pc = (Ho - 1) * We + Wo
    P_pad = _round_up(Pc, 8)                     # sublane alignment
    C_pad = _round_up(Cout, 128)                 # lane-dense output / MXU result
    L = He * We
    L_pad = max(L, base_offsets[-1] + P_pad)

    xe = jnp.pad(xe.reshape(N, L, Ce), ((0, 0), (0, L_pad - L), (0, 0)))
    wq = jnp.pad(wq, ((0, 0), (0, 0), (0, C_pad - Cout))).astype(jnp.bfloat16)

    if use_instance_norm:
        # Bias is not passed: a per-channel constant is exactly cancelled by the
        # affine=False InstanceNorm2d mean subtraction.
        rows = jnp.arange(P_pad)
        extra = ((rows < Pc) & ((rows % We) < Wo)).astype(jnp.float32).reshape(P_pad, 1)
    else:
        extra = jnp.pad(bias.astype(jnp.float32).reshape(1, Cout),
                        ((0, 0), (0, C_pad - Cout)))

    kernel = functools.partial(
        _convblock_kernel,
        base_offsets=base_offsets, p_block=P_pad,
        use_instance_norm=use_instance_norm,
        eps=1e-5, neg_slope=0.2, inv_count=1.0 / float(Ho * Wo))

    # ---- VMEM budget / limit ----------------------------------------------------------
    ce_lane = _round_up(Ce, 128)                 # lane padding of the x VMEM tile
    ce_sub = _round_up(Ce, 8)                    # sublane padding of the weight tile
    vmem_need = (2 * _round_up(L_pad, 8) * ce_lane * 2       # x (bf16, double-buffered)
                 + Kq * ce_sub * C_pad * 2                   # weights (bf16, 1 buffer)
                 + 2 * P_pad * C_pad * 2                     # bf16 output (2 buffers)
                 + P_pad * C_pad * 4                         # f32 accumulator
                 + P_pad * 128 * 4 + 8 * C_pad * 4)          # mask / bias
    try:
        vmem_cap = int(pltpu.get_tpu_info().vmem_capacity_bytes)
    except Exception:
        vmem_cap = 64 << 20                      # conservative (v7x per-TC) fallback
    vmem_limit = int(min(max(vmem_need * 5 // 4, 32 << 20), vmem_cap * 85 // 100))

    cost = pl.CostEstimate(
        flops=2 * N * Kq * P_pad * Ce * C_pad,
        transcendentals=N * C_pad if use_instance_norm else 0,
        bytes_accessed=(N * L_pad * Ce * 2 + Kq * Ce * C_pad * 2
                        + N * P_pad * C_pad * 2),
    )

    out = pl.pallas_call(
        kernel,
        out_shape=jax.ShapeDtypeStruct((N, P_pad, C_pad), jnp.bfloat16),
        grid_spec=pltpu.PrefetchScalarGridSpec(
            num_scalar_prefetch=0,
            grid=(N,),
            in_specs=[
                pl.BlockSpec((1, L_pad, Ce), lambda n: (n, 0, 0)),
                pl.BlockSpec((Kq, Ce, C_pad), lambda n: (0, 0, 0),
                             pipeline_mode=pl.Buffered(1)),
                pl.BlockSpec(extra.shape, lambda n: (0, 0),
                             pipeline_mode=pl.Buffered(1)),
            ],
            out_specs=pl.BlockSpec((1, P_pad, C_pad), lambda n: (n, 0, 0)),
            scratch_shapes=[pltpu.VMEM((P_pad, C_pad), jnp.float32)],
        ),
        compiler_params=pltpu.CompilerParams(
            dimension_semantics=("parallel",),
            vmem_limit_bytes=vmem_limit),
        cost_estimate=cost,
    )(xe, wq, extra)

    # Strip padding / garbage columns, then back to NCHW f32 to match the PyTorch module.
    # TODO(synk): optionally emit NHWC bf16 directly when the consumer is another
    #             channels-last kernel (saves the separate transpose pass).
    out = out[:, :Pc, :Cout]
    out = jnp.pad(out, ((0, 0), (0, Ho * We - Pc), (0, 0)))
    out = out.reshape(N, Ho, We, Cout)[:, :, :Wo, :]
    return out.transpose(0, 3, 1, 2).astype(x.dtype)


def _reference(x, weight, bias, *, use_instance_norm=True):
    """Pure-JAX (f32) reference mirroring the PyTorch forward."""
    Cout = weight.shape[0]
    stride = 1 if Cout == 512 else 2
    xp = jnp.pad(x, ((0, 0), (0, 0), (1, 1), (1, 1)), mode="reflect")
    y = lax.conv_general_dilated(
        xp, weight, window_strides=(stride, stride), padding="VALID",
        dimension_numbers=("NCHW", "OIHW", "NCHW"))
    y = y + bias.reshape(1, -1, 1, 1)
    if use_instance_norm:
        mean = jnp.mean(y, axis=(2, 3), keepdims=True)
        var = jnp.mean((y - mean) ** 2, axis=(2, 3), keepdims=True)
        y = (y - mean) * lax.rsqrt(var + 1e-5)
    return jnp.where(y >= 0, y, 0.2 * y)


def _make_params(key, Cin, Cout):
    kw, kb = jax.random.split(key)
    fan_in = Cin * 4 * 4
    bound = 1.0 / (fan_in ** 0.5)
    weight = jax.random.uniform(kw, (Cout, Cin, 4, 4), jnp.float32, -bound, bound)
    bias = jax.random.uniform(kb, (Cout,), jnp.float32, -bound, bound)
    return weight, bias


if __name__ == "__main__":
    key = jax.random.PRNGKey(0)
    k1, k2, k3, k4 = jax.random.split(key, 4)

    # Tolerances reflect bf16 matmul operands / bf16 output (f32 accumulation).
    TOL = dict(rtol=3e-2, atol=3e-2)

    # --- Test 1: stride-2 branch (Cout != 512), instance norm on -------------------
    N, Cin, Cout, HW = 2, 4, 8, 16
    x = jax.random.normal(k1, (N, Cin, HW, HW), dtype=jnp.float32)
    weight, bias = _make_params(k2, Cin, Cout)
    out = jax.block_until_ready(conv_block_forward(x, weight, bias,
                                                   use_instance_norm=True))
    ref = _reference(x, weight, bias, use_instance_norm=True)
    assert out.shape == (N, Cout, HW // 2, HW // 2)
    assert jnp.allclose(out, ref, **TOL), float(jnp.max(jnp.abs(out - ref)))

    # --- Test 2: same branch, no instance norm (bias path + LeakyReLU) -------------
    out2 = jax.block_until_ready(conv_block_forward(x, weight, bias,
                                                    use_instance_norm=False))
    ref2 = _reference(x, weight, bias, use_instance_norm=False)
    assert jnp.allclose(out2, ref2, **TOL), float(jnp.max(jnp.abs(out2 - ref2)))

    # --- Test 3: stride-1 branch (Cout == 512), 16 kernel-position matmuls ---------
    N3, Cin3, Cout3, HW3 = 2, 64, 512, 8
    x3 = jax.random.normal(k3, (N3, Cin3, HW3, HW3), dtype=jnp.float32)
    w3, b3 = _make_params(k4, Cin3, Cout3)
    out3 = jax.block_until_ready(conv_block_forward(x3, w3, b3,
                                                    use_instance_norm=True))
    ref3 = _reference(x3, w3, b3, use_instance_norm=True)
    assert out3.shape == (N3, Cout3, HW3 - 1, HW3 - 1)
    assert jnp.allclose(out3, ref3, **TOL), float(jnp.max(jnp.abs(out3 - ref3)))

    print("KERNEL_OK")
</pallas_src>

<mosaic_0001>
module attributes {stable_mosaic.version = 11 : i64} {
  func.func @_convblock_kernel(%arg0: i32, %arg1: memref<1x82x16xbf16, #tpu.memory_space<vmem>>, %arg2: memref<4x16x128xbf16, #tpu.memory_space<vmem>>, %arg3: memref<72x1xf32, #tpu.memory_space<vmem>>, %arg4: memref<1x72x128xbf16, #tpu.memory_space<vmem>>, %arg5: memref<72x128xf32, #tpu.memory_space<vmem>>) attributes {dimension_semantics = [#tpu.dimension_semantics<parallel>], iteration_bounds = array<i64: 2>, scalar_prefetch = 0 : i64, scratch_operands = 1 : i64, tpu.core_type = #tpu.core_type<tc>, window_params = [{transform_indices = @transform_0, window_bounds = array<i64: 1, 82, 16>}, {pipeline_mode = #tpu.pipeline_mode<synchronous>, transform_indices = @transform_1, window_bounds = array<i64: 4, 16, 128>}, {pipeline_mode = #tpu.pipeline_mode<synchronous>, transform_indices = @transform_2, window_bounds = array<i64: 72, 1>}, {transform_indices = @transform_3, window_bounds = array<i64: 1, 72, 128>}]} {
    %c0 = arith.constant 0 : index
    %c0_0 = arith.constant 0 : index
    %c0_1 = arith.constant 0 : index
    %0 = vector.load %arg1[%c0, %c0_0, %c0_1] : memref<1x82x16xbf16, #tpu.memory_space<vmem>>, vector<1x72x16xbf16>
    %1 = vector.shape_cast %0 : vector<1x72x16xbf16> to vector<72x16xbf16>
    %c0_2 = arith.constant 0 : index
    %c0_3 = arith.constant 0 : index
    %c0_4 = arith.constant 0 : index
    %2 = vector.load %arg2[%c0_2, %c0_3, %c0_4] : memref<4x16x128xbf16, #tpu.memory_space<vmem>>, vector<1x16x128xbf16>
    %3 = vector.shape_cast %2 : vector<1x16x128xbf16> to vector<16x128xbf16>
    %cst = arith.constant dense<0.000000e+00> : vector<72x128xf32>
    %4 = tpu.matmul %1, %3, %cst {dimension_numbers = #tpu.dot_dimension_numbers<[1], [0], [0], [1], [0, 0, 1, 1], [], []>} : vector<72x16xbf16>, vector<16x128xbf16>, vector<72x128xf32> -> vector<72x128xf32>
    %c0_5 = arith.constant 0 : index
    %c0_6 = arith.constant 0 : index
    %5 = vector.load %arg5[%c0_5, %c0_6] : memref<72x128xf32, #tpu.memory_space<vmem>>, vector<72x128xf32>
    tpu.vector_store %arg5[%c0_5, %c0_6], %4 {strides = array<i32>} : memref<72x128xf32, #tpu.memory_space<vmem>>, vector<72x128xf32>,
    %c0_7 = arith.constant 0 : index
    %c1 = arith.constant 1 : index
    %c0_8 = arith.constant 0 : index
    %6 = vector.load %arg1[%c0_7, %c1, %c0_8] : memref<1x82x16xbf16, #tpu.memory_space<vmem>>, vector<1x72x16xbf16>
    %7 = vector.shape_cast %6 : vector<1x72x16xbf16> to vector<72x16xbf16>
    %c1_9 = arith.constant 1 : index
    %c0_10 = arith.constant 0 : index
    %c0_11 = arith.constant 0 : index
    %8 = vector.load %arg2[%c1_9, %c0_10, %c0_11] : memref<4x16x128xbf16, #tpu.memory_space<vmem>>, vector<1x16x128xbf16>
    %9 = vector.shape_cast %8 : vector<1x16x128xbf16> to vector<16x128xbf16>
    %cst_12 = arith.constant dense<0.000000e+00> : vector<72x128xf32>
    %10 = tpu.matmul %7, %9, %cst_12 {dimension_numbers = #tpu.dot_dimension_numbers<[1], [0], [0], [1], [0, 0, 1, 1], [], []>} : vector<72x16xbf16>, vector<16x128xbf16>, vector<72x128xf32> -> vector<72x128xf32>
    %c0_13 = arith.constant 0 : index
    %c0_14 = arith.constant 0 : index
    %11 = vector.load %arg5[%c0_13, %c0_14] : memref<72x128xf32, #tpu.memory_space<vmem>>, vector<72x128xf32>
    %12 = arith.addf %11, %10 : vector<72x128xf32>
    %c0_15 = arith.constant 0 : index
    %c0_16 = arith.constant 0 : index
    %13 = vector.load %arg5[%c0_15, %c0_16] : memref<72x128xf32, #tpu.memory_space<vmem>>, vector<72x128xf32>
    tpu.vector_store %arg5[%c0_15, %c0_16], %12 {strides = array<i32>} : memref<72x128xf32, #tpu.memory_space<vmem>>, vector<72x128xf32>,
    %c0_17 = arith.constant 0 : index
    %c9 = arith.constant 9 : index
    %c0_18 = arith.constant 0 : index
    %14 = vector.load %arg1[%c0_17, %c9, %c0_18] : memref<1x82x16xbf16, #tpu.memory_space<vmem>>, vector<1x72x16xbf16>
    %15 = vector.shape_cast %14 : vector<1x72x16xbf16> to vector<72x16xbf16>
    %c2 = arith.constant 2 : index
    %c0_19 = arith.constant 0 : index
    %c0_20 = arith.constant 0 : index
    %16 = vector.load %arg2[%c2, %c0_19, %c0_20] : memref<4x16x128xbf16, #tpu.memory_space<vmem>>, vector<1x16x128xbf16>
    %17 = vector.shape_cast %16 : vector<1x16x128xbf16> to vector<16x128xbf16>
    %cst_21 = arith.constant dense<0.000000e+00> : vector<72x128xf32>
    %18 = tpu.matmul %15, %17, %cst_21 {dimension_numbers = #tpu.dot_dimension_numbers<[1], [0], [0], [1], [0, 0, 1, 1], [], []>} : vector<72x16xbf16>, vector<16x128xbf16>, vector<72x128xf32> -> vector<72x128xf32>
    %c0_22 = arith.constant 0 : index
    %c0_23 = arith.constant 0 : index
    %19 = vector.load %arg5[%c0_22, %c0_23] : memref<72x128xf32, #tpu.memory_space<vmem>>, vector<72x128xf32>
    %20 = arith.addf %19, %18 : vector<72x128xf32>
    %c0_24 = arith.constant 0 : index
    %c0_25 = arith.constant 0 : index
    %21 = vector.load %arg5[%c0_24, %c0_25] : memref<72x128xf32, #tpu.memory_space<vmem>>, vector<72x128xf32>
    tpu.vector_store %arg5[%c0_24, %c0_25], %20 {strides = array<i32>} : memref<72x128xf32, #tpu.memory_space<vmem>>, vector<72x128xf32>,
    %c0_26 = arith.constant 0 : index
    %c10 = arith.constant 10 : index
    %c0_27 = arith.constant 0 : index
    %22 = vector.load %arg1[%c0_26, %c10, %c0_27] : memref<1x82x16xbf16, #tpu.memory_space<vmem>>, vector<1x72x16xbf16>
    %23 = vector.shape_cast %22 : vector<1x72x16xbf16> to vector<72x16xbf16>
    %c3 = arith.constant 3 : index
    %c0_28 = arith.constant 0 : index
    %c0_29 = arith.constant 0 : index
    %24 = vector.load %arg2[%c3, %c0_28, %c0_29] : memref<4x16x128xbf16, #tpu.memory_space<vmem>>, vector<1x16x128xbf16>
    %25 = vector.shape_cast %24 : vector<1x16x128xbf16> to vector<16x128xbf16>
    %cst_30 = arith.constant dense<0.000000e+00> : vector<72x128xf32>
    %26 = tpu.matmul %23, %25, %cst_30 {dimension_numbers = #tpu.dot_dimension_numbers<[1], [0], [0], [1], [0, 0, 1, 1], [], []>} : vector<72x16xbf16>, vector<16x128xbf16>, vector<72x128xf32> -> vector<72x128xf32>
    %c0_31 = arith.constant 0 : index
    %c0_32 = arith.constant 0 : index
    %27 = vector.load %arg5[%c0_31, %c0_32] : memref<72x128xf32, #tpu.memory_space<vmem>>, vector<72x128xf32>
    %28 = arith.addf %27, %26 : vector<72x128xf32>
    %c0_33 = arith.constant 0 : index
    %c0_34 = arith.constant 0 : index
    %29 = vector.load %arg5[%c0_33, %c0_34] : memref<72x128xf32, #tpu.memory_space<vmem>>, vector<72x128xf32>
    tpu.vector_store %arg5[%c0_33, %c0_34], %28 {strides = array<i32>} : memref<72x128xf32, #tpu.memory_space<vmem>>, vector<72x128xf32>,
    %c0_35 = arith.constant 0 : index
    %c0_36 = arith.constant 0 : index
    %30 = vector.load %arg5[%c0_35, %c0_36] : memref<72x128xf32, #tpu.memory_space<vmem>>, vector<72x128xf32>
    %c0_37 = arith.constant 0 : index
    %c0_38 = arith.constant 0 : index
    %31 = vector.load %arg3[%c0_37, %c0_38] : memref<72x1xf32, #tpu.memory_space<vmem>>, vector<72x1xf32>
    %32 = vector.broadcast %31 : vector<72x1xf32> to vector<72x128xf32>
    %33 = arith.mulf %30, %32 : vector<72x128xf32>
    %cst_39 = arith.constant dense<0.000000e+00> : vector<128xf32>
    %34 = vector.multi_reduction <add>, %33, %cst_39 [0] : vector<72x128xf32> to vector<128xf32>
    %35 = vector.shape_cast %34 : vector<128xf32> to vector<1x128xf32>
    %cst_40 = arith.constant 1.562500e-02 : f32
    %36 = vector.broadcast %cst_40 : f32 to vector<1x128xf32>
    %37 = arith.mulf %35, %36 : vector<1x128xf32>
    %38 = arith.mulf %33, %30 : vector<72x128xf32>
    %cst_41 = arith.constant dense<0.000000e+00> : vector<128xf32>
    %39 = vector.multi_reduction <add>, %38, %cst_41 [0] : vector<72x128xf32> to vector<128xf32>
    %40 = vector.shape_cast %39 : vector<128xf32> to vector<1x128xf32>
    %cst_42 = arith.constant 1.562500e-02 : f32
    %41 = vector.broadcast %cst_42 : f32 to vector<1x128xf32>
    %42 = arith.mulf %40, %41 : vector<1x128xf32>
    %43 = arith.mulf %37, %37 : vector<1x128xf32>
    %44 = arith.subf %42, %43 : vector<1x128xf32>
    %cst_43 = arith.constant 0.000000e+00 : f32
    %45 = vector.broadcast %cst_43 : f32 to vector<1x128xf32>
    %46 = arith.maximumf %44, %45 : vector<1x128xf32>
    %47 = vector.broadcast %37 : vector<1x128xf32> to vector<72x128xf32>
    %48 = arith.subf %30, %47 : vector<72x128xf32>
    %cst_44 = arith.constant 9.99999974E-6 : f32
    %49 = vector.broadcast %cst_44 : f32 to vector<1x128xf32>
    %50 = arith.addf %46, %49 : vector<1x128xf32>
    %51 = math.rsqrt %50 : vector<1x128xf32>
    %52 = vector.broadcast %51 : vector<1x128xf32> to vector<72x128xf32>
    %53 = arith.mulf %48, %52 : vector<72x128xf32>
    %cst_45 = arith.constant 0.000000e+00 : f32
    %54 = vector.broadcast %cst_45 : f32 to vector<72x128xf32>
    %55 = arith.cmpf oge, %53, %54 : vector<72x128xf32>
    %cst_46 = arith.constant 2.000000e-01 : f32
    %56 = vector.broadcast %cst_46 : f32 to vector<72x128xf32>
    %57 = arith.mulf %56, %53 : vector<72x128xf32>
    %58 = arith.select %55, %53, %57 : vector<72x128xi1>, vector<72x128xf32>
    %59 = arith.truncf %58 : vector<72x128xf32> to vector<72x128xbf16>
    %c0_47 = arith.constant 0 : index
    %c0_48 = arith.constant 0 : index
    %c0_49 = arith.constant 0 : index
    %60 = vector.load %arg4[%c0_47, %c0_48, %c0_49] : memref<1x72x128xbf16, #tpu.memory_space<vmem>>, vector<1x72x128xbf16>
    %61 = vector.shape_cast %60 : vector<1x72x128xbf16> to vector<72x128xbf16>
    %62 = vector.shape_cast %59 : vector<72x128xbf16> to vector<1x72x128xbf16>
    tpu.vector_store %arg4[%c0_47, %c0_48, %c0_49], %62 {strides = array<i32>} : memref<1x72x128xbf16, #tpu.memory_space<vmem>>, vector<1x72x128xbf16>,
    return
  }
  func.func @transform_0(%arg0: i32) -> (i32, i32, i32) {
    %c0_i32 = arith.constant 0 : i32
    %c0_i32_0 = arith.constant 0 : i32
    %c0_i32_1 = arith.constant 0 : i32
    return %arg0, %c0_i32, %c0_i32_0 : i32, i32, i32
  }
  func.func @transform_1(%arg0: i32) -> (i32, i32, i32) {
    %c0_i32 = arith.constant 0 : i32
    %c0_i32_0 = arith.constant 0 : i32
    %c0_i32_1 = arith.constant 0 : i32
    %c0_i32_2 = arith.constant 0 : i32
    return %c0_i32, %c0_i32_0, %c0_i32_1 : i32, i32, i32
  }
  func.func @transform_2(%arg0: i32) -> (i32, i32) {
    %c0_i32 = arith.constant 0 : i32
    %c0_i32_0 = arith.constant 0 : i32
    %c0_i32_1 = arith.constant 0 : i32
    return %c0_i32, %c0_i32_0 : i32, i32
  }
  func.func @transform_3(%arg0: i32) -> (i32, i32, i32) {
    %c0_i32 = arith.constant 0 : i32
    %c0_i32_0 = arith.constant 0 : i32
    %c0_i32_1 = arith.constant 0 : i32
    return %arg0, %c0_i32, %c0_i32_0 : i32, i32, i32
  }
}

</mosaic_0001>

<llo_original>
// kernel: conv_block_forward.1
$region0: #{conv_block_forward.1}
  #allocation0 [shape = 'u32[]', space=smem, size = 0x4, offset = 0x4, fixed_abs, tag = 'smem constant byte address 0x4 - core index']
  #allocation1 [shape = 'u32[144,128]{1,0:T(1,128)}', space=vmem, size = 0x12000, scoped, tag = 'internal scratch']
  #allocation2 [shape = 'f32[72,128]{1,0:T(8,128)}', space=vmem, size = 0x9000, scoped, tag = 'scratch operand']
  %s0 = inlined_call_operand.vmem [shape: bf16[2,82,16], index: 0, kind: input, shape index: {}]
  %s1 = inlined_call_operand.vmem [shape: bf16[4,16,128], index: 1, kind: input, shape index: {}]
  %s2 = inlined_call_operand.vmem [shape: f32[72,1], index: 2, kind: input, shape index: {}]
  %s3 = inlined_call_operand.vmem [shape: bf16[2,72,128], index: 3, kind: output, shape index: {}]
  %s4 = sld [smem:[#allocation0]]
  $region45: #{conv_block_forward.1} parent=0
    _
  %s6 = ssub.s32 1, %s4
  %s7 = scalar_select 0, %s6, %s4
  loop: start=0, step=1, limit=4
  $region2: #{conv_block_forward.1} parent=0 // loop_pre_header
    _
  $region3: #{conv_block_forward.1} parent=0 // loop_header
    %s9 = sphi 0, %s13
    %p10 = scmp.ge.s32.totalorder %s9, 4
    %s19 = sphi 0, %s21
    %s22 = sphi 0, %s19
    %s23 = sphi 0, %s22
    %s39 = sphi 0, %s23
    %s43 = sphi 0, %s43
    %s45 = sphi 0, %s43
    %s46 = sphi 0, %s45
    %s60 = sphi 0, %s46
    %s64 = sphi 0, %s64
    %s66 = sphi 0, %s64
    %s67 = sphi 0, %s66
    %s81 = sphi 0, %s67
    %s87 = sphi 0, %s89
    %s90 = sphi 0, %s87
    %s91 = sphi 0, %s90
    %s107 = sphi 0, %s91
  $region4: #{conv_block_forward.1} parent=0 // loop_header_branch
    %12 = sbr.rel (%p10) target = $region8
  $region5: #{conv_block_forward.1} parent=0 // loop_body
    %s14 = ssub.s32 %s9, 1
    %s15 = ssub.s32 %s9, 2
    %s16 = sadd.s32 %s9, 1
    %s17 = ssub.s32 %s9, %s16
    %p18 = scmp.eq.s32.totalorder %s17, 0
    %s20 = sadd.s32 %s19, 1
    %s21 = scalar_select %p18, %s19, %s20
    %p24 = pneg %p18
    %p25 = scmp.eq.s32.totalorder %s9, 1
    %p26 = por %p24, %p25
    %p27 = scmp.ne.s32.totalorder %s19, %s22
    %p28 = scmp.eq.s32.totalorder %s9, 0
    %p29 = por %p27, %p28
    %p30 = scmp.ne.s32.totalorder %s19, %s22
    %p31 = scmp.eq.s32.totalorder %s14, 1
    %p32 = por %p30, %p31
    %p33 = scmp.ne.s32.totalorder %s22, %s23
    %p34 = scmp.eq.s32.totalorder %s14, 0
    %p35 = por %p33, %p34
    %p36 = scmp.ne.s32.totalorder %s22, %s23
    %p37 = scmp.eq.s32.totalorder %s15, 1
    %p38 = por %p36, %p37
    %p40 = scmp.ne.s32.totalorder %s23, %s39
    %p41 = scmp.eq.s32.totalorder %s15, 0
    %p42 = por %p40, %p41
    %s44 = sadd.s32 %s43, 1
    %p47 = scmp.eq.s32.totalorder %s9, 1
    %p48 = scmp.ne.s32.totalorder %s43, %s45
    %p49 = scmp.eq.s32.totalorder %s9, 0
    %p50 = por %p48, %p49
    %p51 = scmp.ne.s32.totalorder %s43, %s45
    %p52 = scmp.eq.s32.totalorder %s14, 1
    %p53 = por %p51, %p52
    %p54 = scmp.ne.s32.totalorder %s45, %s46
    %p55 = scmp.eq.s32.totalorder %s14, 0
    %p56 = por %p54, %p55
    %p57 = scmp.ne.s32.totalorder %s45, %s46
    %p58 = scmp.eq.s32.totalorder %s15, 1
    %p59 = por %p57, %p58
    %p61 = scmp.ne.s32.totalorder %s46, %s60
    %p62 = scmp.eq.s32.totalorder %s15, 0
    %p63 = por %p61, %p62
    %s65 = sadd.s32 %s64, 1
    %p68 = scmp.eq.s32.totalorder %s9, 1
    %p69 = scmp.ne.s32.totalorder %s64, %s66
    %p70 = scmp.eq.s32.totalorder %s9, 0
    %p71 = por %p69, %p70
    %p72 = scmp.ne.s32.totalorder %s64, %s66
    %p73 = scmp.eq.s32.totalorder %s14, 1
    %p74 = por %p72, %p73
    %p75 = scmp.ne.s32.totalorder %s66, %s67
    %p76 = scmp.eq.s32.totalorder %s14, 0
    %p77 = por %p75, %p76
    %p78 = scmp.ne.s32.totalorder %s66, %s67
    %p79 = scmp.eq.s32.totalorder %s15, 1
    %p80 = por %p78, %p79
    %p82 = scmp.ne.s32.totalorder %s67, %s81
    %p83 = scmp.eq.s32.totalorder %s15, 0
    %p84 = por %p82, %p83
    %s85 = ssub.s32 %s9, %s16
    %p86 = scmp.eq.s32.totalorder %s85, 0
    %s88 = sadd.s32 %s87, 1
    %s89 = scalar_select %p86, %s87, %s88
    %p92 = pneg %p86
    %p93 = scmp.eq.s32.totalorder %s9, 1
    %p94 = por %p92, %p93
    %p95 = scmp.ne.s32.totalorder %s87, %s90
    %p96 = scmp.eq.s32.totalorder %s9, 0
    %p97 = por %p95, %p96
    %p98 = scmp.ne.s32.totalorder %s87, %s90
    %p99 = scmp.eq.s32.totalorder %s14, 1
    %p100 = por %p98, %p99
    %p101 = scmp.ne.s32.totalorder %s90, %s91
    %p102 = scmp.eq.s32.totalorder %s14, 0
    %p103 = por %p101, %p102
    %p104 = scmp.ne.s32.totalorder %s90, %s91
    %p105 = scmp.eq.s32.totalorder %s15, 1
    %p106 = por %p104, %p105
    %p108 = scmp.ne.s32.totalorder %s91, %s107
    %p109 = scmp.eq.s32.totalorder %s15, 0
    %p110 = por %p108, %p109
    %p111 = scmp.le.s32.totalorder 1, %s9
    %p112 = scmp.lt.s32.totalorder %s9, 3
    %p113 = pnand %p111, %p112
    %p114 = pneg %p113
    // Predicated region
    $region9: #{conv_block_forward.1} parent=5 // pred_check
      _
    $region10: #{conv_block_forward.1} parent=5 // pred_check_branch
      %116 = sbr.rel (%p113) target = $region12
    $region11: #{conv_block_forward.1} parent=5 // pred_region
      %s117 = ssub.s32 %s9, 1
      // Predicated region
      $region13: #{conv_block_forward.1} parent=11 // pred_check
        %p118 = pneg %p56
      $region14: #{conv_block_forward.1} parent=11 // pred_check_branch
        %120 = sbr.rel (%p118) target = $region16
      $region15: #{conv_block_forward.1} parent=11 // pred_region
        _
      $region16: #{conv_block_forward.1} parent=11 // pred_fallthru
        _
      // Predicated region
      $region17: #{conv_block_forward.1} parent=11 // pred_check
        %p121 = pneg %p77
      $region18: #{conv_block_forward.1} parent=11 // pred_check_branch
        %123 = sbr.rel (%p121) target = $region20
      $region19: #{conv_block_forward.1} parent=11 // pred_region
        _
      $region20: #{conv_block_forward.1} parent=11 // pred_fallthru
        _
    $region12: #{conv_block_forward.1} parent=5 // pred_fallthru
      _
    %p124 = scmp.lt.s32.totalorder %s9, 2
    // Predicated region
    $region21: #{conv_block_forward.1} parent=5 // pred_check
      %p125 = pneg %p124
    $region22: #{conv_block_forward.1} parent=5 // pred_check_branch
      %127 = sbr.rel (%p125) target = $region24
    $region23: #{conv_block_forward.1} parent=5 // pred_region
      // Predicated region
      $region25: #{conv_block_forward.1} parent=23 // pred_check
        %p128 = pneg %p29
      $region26: #{conv_block_forward.1} parent=23 // pred_check_branch
        %130 = sbr.rel (%p128) target = $region28
      $region27: #{conv_block_forward.1} parent=23 // pred_region
        %p131 = scmp.lt.s32.totalorder %s9, 1
        %s132 = scalar_select %p131, %s9, 1
        %s133 = smul.addr %s132, 11
        %s134 = smul.addr %s133, 4
        %s135 = scalar_lea.vmem %s0, %s134
      $region28: #{conv_block_forward.1} parent=23 // pred_fallthru
        _
    $region24: #{conv_block_forward.1} parent=5 // pred_fallthru
      _
    %p136 = scmp.le.s32.totalorder 1, %s9
    %p137 = scmp.lt.s32.totalorder %s9, 3
    %p138 = pnand %p136, %p137
    %p139 = pneg %p138
    // Predicated region
    $region29: #{conv_block_forward.1} parent=5 // pred_check
      _
    $region30: #{conv_block_forward.1} parent=5 // pred_check_branch
      %141 = sbr.rel (%p138) target = $region32
    $region31: #{conv_block_forward.1} parent=5 // pred_region
      %s142 = ssub.s32 %s9, 1
      %p143 = scmp.lt.s32.totalorder %s14, 1
      %s144 = scalar_select %p143, %s14, 1
      %s145 = smul.addr %s144, 11
      %s146 = smul.addr %s145, 4
      %s147 = scalar_lea.vmem %s0, %s146
      %p148 = pneg %p35
      %p149 = pneg %p32
      %p150 = pneg %p56
      %p151 = pneg %p53
      %p152 = pneg %p77
      %p153 = pneg %p74
      %p154 = pneg %p103
      %p155 = pneg %p100
      %p156 = scmp.lt.s32.totalorder %s14, 1
      %s157 = scalar_select %p156, %s14, 1
      %s158 = smul.addr %s157, 9
      %s159 = smul.addr %s158, 4
      %s160 = scalar_lea.vmem %s3, %s159
      %p161 = scmp.lt.s32.totalorder %s14, 1
      %s162 = scalar_select %p161, %s14, 1
      %s163 = smul.addr %s162, 11
      %s164 = smul.addr %s163, 4
      %s165 = scalar_lea.vmem %s0, %s164
      %p166 = scmp.lt.s32.totalorder %s14, 1
      %s167 = scalar_select %p166, %s14, 1
      %s168 = smul.addr %s167, 9
      %s169 = smul.addr %s168, 4
      %s170 = scalar_lea.vmem %s3, %s169
      %v172 = vld [vmem:[%s165] sm:$0xf]
      %v173 = vld [vmem:[%s165 + $0x4] sm:$0xf]
      %v174 = vld [vmem:[%s165 + $0x8] sm:$0xf]
      %v175 = vld [vmem:[%s165 + $0xc] sm:$0xf]
      %v176 = vld [vmem:[%s165 + $0x10] sm:$0xf]
      %v177 = vld [vmem:[%s165 + $0x14] sm:$0xf]
      %v178 = vld [vmem:[%s165 + $0x18] sm:$0xf]
      %v179 = vld [vmem:[%s165 + $0x1c] sm:$0xf]
      %v180 = vld [vmem:[%s165 + $0x20] sm:$0xf]
      %v181 = vld [vmem:[%s1] sm:$0xf]
      %v182 = vld [vmem:[%s1 + $0x4] sm:$0xf]
      %v192 = vunpack.c.l.b16 %v172
      %v193 = vunpack.c.l.b16 %v173
      %v194 = vunpack.c.l.b16 %v174
      %v195 = vunpack.c.l.b16 %v175
      %v196 = vunpack.c.l.b16 %v176
      %v197 = vunpack.c.l.b16 %v177
      %v198 = vunpack.c.l.b16 %v178
      %v199 = vunpack.c.l.b16 %v179
      %v200 = vunpack.c.l.b16 %v180
      %v201 = vpack.c.b16 %v193, %v192
      %v202 = vpack.c.b16 %v195, %v194
      %v203 = vpack.c.b16 %v197, %v196
      %v204 = vpack.c.b16 %v199, %v198
      %v205 = vpack.c.b16 %v200, %v200
      %v208 = vunpack.c.l.b16 %v181
      %v209 = vunpack.c.l.b16 %v182
      %v210 = vpack.c.b16 %v209, %v208
      %vm212 = vcmask 130048
      %v214 = vsel %vm212, %v201, 0
      %v217 = vsel %vm212, %v202, 0
      %v220 = vsel %vm212, %v203, 0
      %v223 = vsel %vm212, %v204, 0
      %v226 = vsel %vm212, %v205, 0
      %228 = vmatprep.subr.bf16.mxu0 0
      %229 = vmatpush1.bf16.msra.mxu0 0
      %230 = vmatprep.subr.bf16.mxu0 0
      %231 = vmatpush1.bf16.msra.mxu0 0
      %232 = vmatprep.subr.bf16.mxu0 0
      %233 = vmatpush1.bf16.msra.mxu0 0
      %234 = vmatprep.subr.bf16.mxu0 0
      %235 = vmatpush1.bf16.msra.mxu0 0
      %236 = vmatprep.subr.bf16.mxu0 0
      %237 = vmatpush1.bf16.msra.mxu0 0
      %238 = vmatprep.subr.bf16.mxu0 0
      %239 = vmatpush1.bf16.msra.mxu0 0
      %240 = vmatprep.subr.bf16.mxu0 0
      %241 = vmatpush1.bf16.msra.mxu0 0
      %242 = vmatprep.subr.bf16.mxu0 0
      %243 = vmatpush1.bf16.msra.mxu0 %v210
      %244 = vmatprep.subr.bf16.mxu0 0
      %245 = vmatpush2.bf16.msra.mxu0 0
      %246 = vmatprep.subr.bf16.mxu0 0
      %247 = vmatpush2.bf16.msra.mxu0 0
      %248 = vmatprep.subr.bf16.mxu0 0
      %249 = vmatpush2.bf16.msra.mxu0 0
      %250 = vmatprep.subr.bf16.mxu0 0
      %251 = vmatpush2.bf16.msra.mxu0 0
      %252 = vmatprep.subr.bf16.mxu0 0
      %253 = vmatpush2.bf16.msra.mxu0 0
      %254 = vmatprep.subr.bf16.mxu0 0
      %255 = vmatpush2.bf16.msra.mxu0 0
      %256 = vmatprep.subr.bf16.mxu0 0
      %257 = vmatpush2.bf16.msra.mxu0 0
      %258 = vmatprep.subr.bf16.mxu0 0
      %259 = vmatpush2.bf16.msra.mxu0 0
      %260 = vmatprep.mubr.bf16.mxu0 0
      %261 = vmatmul.mubr.bf16.gmra.mxu0 %v214
      %v262 = vpop.f32.mrf.mxu0
      %v263 = vadd.f32 0.0, %v262
      %v264 = vpop.f32.mrf.mxu0
      %v265 = vpop.f32.mrf.mxu0
      %v266 = vadd.f32 0.0, %v265
      %v267 = vpop.f32.mrf.mxu0
      %268 = vmatprep.mubr.bf16.mxu0 0
      %269 = vmatmul.mubr.bf16.gmra.mxu0 %v217
      %v270 = vpop.f32.mrf.mxu0
      %v271 = vadd.f32 0.0, %v270
      %v272 = vpop.f32.mrf.mxu0
      %v273 = vpop.f32.mrf.mxu0
      %v274 = vadd.f32 0.0, %v273
      %v275 = vpop.f32.mrf.mxu0
      %276 = vmatprep.mubr.bf16.mxu0 0
      %277 = vmatmul.mubr.bf16.gmra.mxu0 %v220
      %v278 = vpop.f32.mrf.mxu0
      %v279 = vadd.f32 0.0, %v278
      %v280 = vpop.f32.mrf.mxu0
      %v281 = vpop.f32.mrf.mxu0
      %v282 = vadd.f32 0.0, %v281
      %v283 = vpop.f32.mrf.mxu0
      %284 = vmatprep.mubr.bf16.mxu0 0
      %285 = vmatmul.mubr.bf16.gmra.mxu0 %v223
      %v286 = vpop.f32.mrf.mxu0
      %v287 = vadd.f32 0.0, %v286
      %v288 = vpop.f32.mrf.mxu0
      %v289 = vpop.f32.mrf.mxu0
      %v290 = vadd.f32 0.0, %v289
      %v291 = vpop.f32.mrf.mxu0
      %292 = vmatprep.mubr.bf16.mxu0 0
      %293 = vmatmul.mubr.bf16.gmra.mxu0 %v226
      %v294 = vpop.f32.mrf.mxu0
      %v295 = vadd.f32 0.0, %v294
      %v296 = vpop.f32.mrf.mxu0
      %v297 = vpop.f32.mrf.mxu0
      %v298 = vpop.f32.mrf.mxu0
      %299 = vdwg.mxu0
      %300 = vst [vmem:[#allocation2] sm:$0xff] %v263
      %301 = vst [vmem:[#allocation2 + $0x8] sm:$0xff] %v266
      %302 = vst [vmem:[#allocation2 + $0x10] sm:$0xff] %v271
      %303 = vst [vmem:[#allocation2 + $0x18] sm:$0xff] %v274
      %304 = vst [vmem:[#allocation2 + $0x20] sm:$0xff] %v279
      %305 = vst [vmem:[#allocation2 + $0x28] sm:$0xff] %v282
      %306 = vst [vmem:[#allocation2 + $0x30] sm:$0xff] %v287
      %307 = vst [vmem:[#allocation2 + $0x38] sm:$0xff] %v290
      %308 = vst [vmem:[#allocation2 + $0x40] sm:$0xff] %v295
      %v309 = vld [vmem:[%s165] sm:$0xf]
      %v310 = vld [vmem:[%s165 + $0x4] sm:$0xf]
      %v311 = vld [vmem:[%s165 + $0x8] sm:$0xf]
      %v312 = vld [vmem:[%s165 + $0xc] sm:$0xf]
      %v313 = vld [vmem:[%s165 + $0x10] sm:$0xf]
      %v314 = vld [vmem:[%s165 + $0x14] sm:$0xf]
      %v315 = vld [vmem:[%s165 + $0x18] sm:$0xf]
      %v316 = vld [vmem:[%s165 + $0x1c] sm:$0xf]
      %v317 = vld [vmem:[%s165 + $0x20] sm:$0xf]
      %v318 = vld [vmem:[%s165 + $0x24] sm:$0x1]
      %s319 = scalar_lea.vmem %s1, 8
      %v320 = vld [vmem:[%s319] sm:$0xf]
      %v321 = vld [vmem:[%s319 + $0x4] sm:$0xf]
      %v332 = vunpack.c.l.b16 %v309
      %v333 = vunpack.c.l.b16 %v310
      %v334 = vunpack.c.l.b16 %v311
      %v335 = vunpack.c.l.b16 %v312
      %v336 = vunpack.c.l.b16 %v313
      %v337 = vunpack.c.l.b16 %v314
      %v338 = vunpack.c.l.b16 %v315
      %v339 = vunpack.c.l.b16 %v316
      %v340 = vunpack.c.l.b16 %v317
      %v341 = vunpack.c.l.b16 %v318
      %v342 = vpack.c.b16 %v333, %v332
      %v343 = vpack.c.b16 %v335, %v334
      %v344 = vpack.c.b16 %v337, %v336
      %v345 = vpack.c.b16 %v339, %v338
      %v346 = vpack.c.b16 %v341, %v340
      %vm347 = vsmask.f32 7424
      %v349 = vshrl.u32 %v342, 16
      %v351 = vshll.u32 %v342, 16
      %v353 = vrot.slane %v351, 1
      %v354 = vor.u32 %v349, %v353
      %v356 = vshll.u32 %v343, 16
      %v358 = vrot.slane %v356, 1
      %v359 = vsel %vm347, %v354, %v358
      %v360 = vshrl.u32 %v343, 16
      %v362 = vor.u32 %v360, %v358
      %v364 = vshll.u32 %v344, 16
      %v366 = vrot.slane %v364, 1
      %v367 = vsel %vm347, %v362, %v366
      %v368 = vshrl.u32 %v344, 16
      %v370 = vor.u32 %v368, %v366
      %v372 = vshll.u32 %v345, 16
      %v374 = vrot.slane %v372, 1
      %v375 = vsel %vm347, %v370, %v374
      %v376 = vshrl.u32 %v345, 16
      %v378 = vor.u32 %v376, %v374
      %v380 = vshll.u32 %v346, 16
      %v382 = vrot.slane %v380, 1
      %v383 = vsel %vm347, %v378, %v382
      %v384 = vshrl.u32 %v346, 16
      %v386 = vor.u32 %v384, %v382
      %v389 = vunpack.c.l.b16 %v320
      %v390 = vunpack.c.l.b16 %v321
      %v391 = vpack.c.b16 %v390, %v389
      %v394 = vsel %vm212, %v359, 0
      %v397 = vsel %vm212, %v367, 0
      %v400 = vsel %vm212, %v375, 0
      %v403 = vsel %vm212, %v383, 0
      %v406 = vsel %vm212, %v386, 0
      %408 = vmatprep.subr.bf16.mxu0 0
      %409 = vmatpush1.bf16.msra.mxu0 0
      %410 = vmatprep.subr.bf16.mxu0 0
      %411 = vmatpush1.bf16.msra.mxu0 0
      %412 = vmatprep.subr.bf16.mxu0 0
      %413 = vmatpush1.bf16.msra.mxu0 0
      %414 = vmatprep.subr.bf16.mxu0 0
      %415 = vmatpush1.bf16.msra.mxu0 0
      %416 = vmatprep.subr.bf16.mxu0 0
      %417 = vmatpush1.bf16.msra.mxu0 0
      %418 = vmatprep.subr.bf16.mxu0 0
      %419 = vmatpush1.bf16.msra.mxu0 0
      %420 = vmatprep.subr.bf16.mxu0 0
      %421 = vmatpush1.bf16.msra.mxu0 0
      %422 = vmatprep.subr.bf16.mxu0 0
      %423 = vmatpush1.bf16.msra.mxu0 %v391
      %424 = vmatprep.subr.bf16.mxu0 0
      %425 = vmatpush2.bf16.msra.mxu0 0
      %426 = vmatprep.subr.bf16.mxu0 0
      %427 = vmatpush2.bf16.msra.mxu0 0
      %428 = vmatprep.subr.bf16.mxu0 0
      %429 = vmatpush2.bf16.msra.mxu0 0
      %430 = vmatprep.subr.bf16.mxu0 0
      %431 = vmatpush2.bf16.msra.mxu0 0
      %432 = vmatprep.subr.bf16.mxu0 0
      %433 = vmatpush2.bf16.msra.mxu0 0
      %434 = vmatprep.subr.bf16.mxu0 0
      %435 = vmatpush2.bf16.msra.mxu0 0
      %436 = vmatprep.subr.bf16.mxu0 0
      %437 = vmatpush2.bf16.msra.mxu0 0
      %438 = vmatprep.subr.bf16.mxu0 0
      %439 = vmatpush2.bf16.msra.mxu0 0
      %440 = vmatprep.mubr.bf16.mxu0 0
      %441 = vmatmul.mubr.bf16.gmra.mxu0 %v394
      %v442 = vpop.f32.mrf.mxu0
      %v443 = vadd.f32 0.0, %v442
      %v444 = vpop.f32.mrf.mxu0
      %v445 = vpop.f32.mrf.mxu0
      %v446 = vadd.f32 0.0, %v445
      %v447 = vpop.f32.mrf.mxu0
      %448 = vmatprep.mubr.bf16.mxu0 0
      %449 = vmatmul.mubr.bf16.gmra.mxu0 %v397
      %v450 = vpop.f32.mrf.mxu0
      %v451 = vadd.f32 0.0, %v450
      %v452 = vpop.f32.mrf.mxu0
      %v453 = vpop.f32.mrf.mxu0
      %v454 = vadd.f32 0.0, %v453
      %v455 = vpop.f32.mrf.mxu0
      %456 = vmatprep.mubr.bf16.mxu0 0
      %457 = vmatmul.mubr.bf16.gmra.mxu0 %v400
      %v458 = vpop.f32.mrf.mxu0
      %v459 = vadd.f32 0.0, %v458
      %v460 = vpop.f32.mrf.mxu0
      %v461 = vpop.f32.mrf.mxu0
      %v462 = vadd.f32 0.0, %v461
      %v463 = vpop.f32.mrf.mxu0
      %464 = vmatprep.mubr.bf16.mxu0 0
      %465 = vmatmul.mubr.bf16.gmra.mxu0 %v403
      %v466 = vpop.f32.mrf.mxu0
      %v467 = vadd.f32 0.0, %v466
      %v468 = vpop.f32.mrf.mxu0
      %v469 = vpop.f32.mrf.mxu0
      %v470 = vadd.f32 0.0, %v469
      %v471 = vpop.f32.mrf.mxu0
      %472 = vmatprep.mubr.bf16.mxu0 0
      %473 = vmatmul.mubr.bf16.gmra.mxu0 %v406
      %v474 = vpop.f32.mrf.mxu0
      %v475 = vadd.f32 0.0, %v474
      %v476 = vpop.f32.mrf.mxu0
      %v477 = vpop.f32.mrf.mxu0
      %v478 = vpop.f32.mrf.mxu0
      %479 = vdwg.mxu0
      %v480 = vld [vmem:[#allocation2] sm:$0xff]
      %v481 = vld [vmem:[#allocation2 + $0x8] sm:$0xff]
      %v482 = vld [vmem:[#allocation2 + $0x10] sm:$0xff]
      %v483 = vld [vmem:[#allocation2 + $0x18] sm:$0xff]
      %v484 = vld [vmem:[#allocation2 + $0x20] sm:$0xff]
      %v485 = vld [vmem:[#allocation2 + $0x28] sm:$0xff]
      %v486 = vld [vmem:[#allocation2 + $0x30] sm:$0xff]
      %v487 = vld [vmem:[#allocation2 + $0x38] sm:$0xff]
      %v488 = vld [vmem:[#allocation2 + $0x40] sm:$0xff]
      %v489 = vadd.f32 %v480, %v443
      %v490 = vadd.f32 %v481, %v446
      %v491 = vadd.f32 %v482, %v451
      %v492 = vadd.f32 %v483, %v454
      %v493 = vadd.f32 %v484, %v459
      %v494 = vadd.f32 %v485, %v462
      %v495 = vadd.f32 %v486, %v467
      %v496 = vadd.f32 %v487, %v470
      %v497 = vadd.f32 %v488, %v475
      %498 = vst [vmem:[#allocation2] sm:$0xff] %v489
      %499 = vst [vmem:[#allocation2 + $0x8] sm:$0xff] %v490
      %500 = vst [vmem:[#allocation2 + $0x10] sm:$0xff] %v491
      %501 = vst [vmem:[#allocation2 + $0x18] sm:$0xff] %v492
      %502 = vst [vmem:[#allocation2 + $0x20] sm:$0xff] %v493
      %503 = vst [vmem:[#allocation2 + $0x28] sm:$0xff] %v494
      %504 = vst [vmem:[#allocation2 + $0x30] sm:$0xff] %v495
      %505 = vst [vmem:[#allocation2 + $0x38] sm:$0xff] %v496
      %506 = vst [vmem:[#allocation2 + $0x40] sm:$0xff] %v497
      %v507 = vld [vmem:[%s165 + $0x4] sm:$0xf]
      %v508 = vld [vmem:[%s165 + $0x8] sm:$0xf]
      %v509 = vld [vmem:[%s165 + $0xc] sm:$0xf]
      %v510 = vld [vmem:[%s165 + $0x10] sm:$0xf]
      %v511 = vld [vmem:[%s165 + $0x14] sm:$0xf]
      %v512 = vld [vmem:[%s165 + $0x18] sm:$0xf]
      %v513 = vld [vmem:[%s165 + $0x1c] sm:$0xf]
      %v514 = vld [vmem:[%s165 + $0x20] sm:$0xf]
      %v515 = vld [vmem:[%s165 + $0x24] sm:$0xf]
      %v516 = vld [vmem:[%s165 + $0x28] sm:$0x1]
      %s517 = scalar_lea.vmem %s1, 16
      %v518 = vld [vmem:[%s517] sm:$0xf]
      %v519 = vld [vmem:[%s517 + $0x4] sm:$0xf]
      %v530 = vunpack.c.l.b16 %v507
      %v531 = vunpack.c.l.b16 %v508
      %v532 = vunpack.c.l.b16 %v509
      %v533 = vunpack.c.l.b16 %v510
      %v534 = vunpack.c.l.b16 %v511
      %v535 = vunpack.c.l.b16 %v512
      %v536 = vunpack.c.l.b16 %v513
      %v537 = vunpack.c.l.b16 %v514
      %v538 = vunpack.c.l.b16 %v515
      %v539 = vunpack.c.l.b16 %v516
      %v540 = vpack.c.b16 %v531, %v530
      %v541 = vpack.c.b16 %v533, %v532
      %v542 = vpack.c.b16 %v535, %v534
      %v543 = vpack.c.b16 %v537, %v536
      %v544 = vpack.c.b16 %v539, %v538
      %v546 = vshrl.u32 %v540, 16
      %v548 = vshll.u32 %v540, 16
      %v550 = vrot.slane %v548, 1
      %v551 = vor.u32 %v546, %v550
      %v553 = vshll.u32 %v541, 16
      %v555 = vrot.slane %v553, 1
      %v556 = vsel %vm347, %v551, %v555
      %v557 = vshrl.u32 %v541, 16
      %v559 = vor.u32 %v557, %v555
      %v561 = vshll.u32 %v542, 16
      %v563 = vrot.slane %v561, 1
      %v564 = vsel %vm347, %v559, %v563
      %v565 = vshrl.u32 %v542, 16
      %v567 = vor.u32 %v565, %v563
      %v569 = vshll.u32 %v543, 16
      %v571 = vrot.slane %v569, 1
      %v572 = vsel %vm347, %v567, %v571
      %v573 = vshrl.u32 %v543, 16
      %v575 = vor.u32 %v573, %v571
      %v577 = vshll.u32 %v544, 16
      %v579 = vrot.slane %v577, 1
      %v580 = vsel %vm347, %v575, %v579
      %v581 = vshrl.u32 %v544, 16
      %v583 = vor.u32 %v581, %v579
      %v586 = vunpack.c.l.b16 %v518
      %v587 = vunpack.c.l.b16 %v519
      %v588 = vpack.c.b16 %v587, %v586
      %v591 = vsel %vm212, %v556, 0
      %v594 = vsel %vm212, %v564, 0
      %v597 = vsel %vm212, %v572, 0
      %v600 = vsel %vm212, %v580, 0
      %v603 = vsel %vm212, %v583, 0
      %605 = vmatprep.subr.bf16.mxu0 0
      %606 = vmatpush1.bf16.msra.mxu0 0
      %607 = vmatprep.subr.bf16.mxu0 0
      %608 = vmatpush1.bf16.msra.mxu0 0
      %609 = vmatprep.subr.bf16.mxu0 0
      %610 = vmatpush1.bf16.msra.mxu0 0
      %611 = vmatprep.subr.bf16.mxu0 0
      %612 = vmatpush1.bf16.msra.mxu0 0
      %613 = vmatprep.subr.bf16.mxu0 0
      %614 = vmatpush1.bf16.msra.mxu0 0
      %615 = vmatprep.subr.bf16.mxu0 0
      %616 = vmatpush1.bf16.msra.mxu0 0
      %617 = vmatprep.subr.bf16.mxu0 0
      %618 = vmatpush1.bf16.msra.mxu0 0
      %619 = vmatprep.subr.bf16.mxu0 0
      %620 = vmatpush1.bf16.msra.mxu0 %v588
      %621 = vmatprep.subr.bf16.mxu0 0
      %622 = vmatpush2.bf16.msra.mxu0 0
      %623 = vmatprep.subr.bf16.mxu0 0
      %624 = vmatpush2.bf16.msra.mxu0 0
      %625 = vmatprep.subr.bf16.mxu0 0
      %626 = vmatpush2.bf16.msra.mxu0 0
      %627 = vmatprep.subr.bf16.mxu0 0
      %628 = vmatpush2.bf16.msra.mxu0 0
      %629 = vmatprep.subr.bf16.mxu0 0
      %630 = vmatpush2.bf16.msra.mxu0 0
      %631 = vmatprep.subr.bf16.mxu0 0
      %632 = vmatpush2.bf16.msra.mxu0 0
      %633 = vmatprep.subr.bf16.mxu0 0
      %634 = vmatpush2.bf16.msra.mxu0 0
      %635 = vmatprep.subr.bf16.mxu0 0
      %636 = vmatpush2.bf16.msra.mxu0 0
      %637 = vmatprep.mubr.bf16.mxu0 0
      %638 = vmatmul.mubr.bf16.gmra.mxu0 %v591
      %v639 = vpop.f32.mrf.mxu0
      %v640 = vadd.f32 0.0, %v639
      %v641 = vpop.f32.mrf.mxu0
      %v642 = vpop.f32.mrf.mxu0
      %v643 = vadd.f32 0.0, %v642
      %v644 = vpop.f32.mrf.mxu0
      %645 = vmatprep.mubr.bf16.mxu0 0
      %646 = vmatmul.mubr.bf16.gmra.mxu0 %v594
      %v647 = vpop.f32.mrf.mxu0
      %v648 = vadd.f32 0.0, %v647
      %v649 = vpop.f32.mrf.mxu0
      %v650 = vpop.f32.mrf.mxu0
      %v651 = vadd.f32 0.0, %v650
      %v652 = vpop.f32.mrf.mxu0
      %653 = vmatprep.mubr.bf16.mxu0 0
      %654 = vmatmul.mubr.bf16.gmra.mxu0 %v597
      %v655 = vpop.f32.mrf.mxu0
      %v656 = vadd.f32 0.0, %v655
      %v657 = vpop.f32.mrf.mxu0
      %v658 = vpop.f32.mrf.mxu0
      %v659 = vadd.f32 0.0, %v658
      %v660 = vpop.f32.mrf.mxu0
      %661 = vmatprep.mubr.bf16.mxu0 0
      %662 = vmatmul.mubr.bf16.gmra.mxu0 %v600
      %v663 = vpop.f32.mrf.mxu0
      %v664 = vadd.f32 0.0, %v663
      %v665 = vpop.f32.mrf.mxu0
      %v666 = vpop.f32.mrf.mxu0
      %v667 = vadd.f32 0.0, %v666
      %v668 = vpop.f32.mrf.mxu0
      %669 = vmatprep.mubr.bf16.mxu0 0
      %670 = vmatmul.mubr.bf16.gmra.mxu0 %v603
      %v671 = vpop.f32.mrf.mxu0
      %v672 = vadd.f32 0.0, %v671
      %v673 = vpop.f32.mrf.mxu0
      %v674 = vpop.f32.mrf.mxu0
      %v675 = vpop.f32.mrf.mxu0
      %676 = vdwg.mxu0
      %v677 = vld [vmem:[#allocation2] sm:$0xff]
      %v678 = vld [vmem:[#allocation2 + $0x8] sm:$0xff]
      %v679 = vld [vmem:[#allocation2 + $0x10] sm:$0xff]
      %v680 = vld [vmem:[#allocation2 + $0x18] sm:$0xff]
      %v681 = vld [vmem:[#allocation2 + $0x20] sm:$0xff]
      %v682 = vld [vmem:[#allocation2 + $0x28] sm:$0xff]
      %v683 = vld [vmem:[#allocation2 + $0x30] sm:$0xff]
      %v684 = vld [vmem:[#allocation2 + $0x38] sm:$0xff]
      %v685 = vld [vmem:[#allocation2 + $0x40] sm:$0xff]
      %v686 = vadd.f32 %v677, %v640
      %v687 = vadd.f32 %v678, %v643
      %v688 = vadd.f32 %v679, %v648
      %v689 = vadd.f32 %v680, %v651
      %v690 = vadd.f32 %v681, %v656
      %v691 = vadd.f32 %v682, %v659
      %v692 = vadd.f32 %v683, %v664
      %v693 = vadd.f32 %v684, %v667
      %v694 = vadd.f32 %v685, %v672
      %695 = vst [vmem:[#allocation2] sm:$0xff] %v686
      %696 = vst [vmem:[#allocation2 + $0x8] sm:$0xff] %v687
      %697 = vst [vmem:[#allocation2 + $0x10] sm:$0xff] %v688
      %698 = vst [vmem:[#allocation2 + $0x18] sm:$0xff] %v689
      %699 = vst [vmem:[#allocation2 + $0x20] sm:$0xff] %v690
      %700 = vst [vmem:[#allocation2 + $0x28] sm:$0xff] %v691
      %701 = vst [vmem:[#allocation2 + $0x30] sm:$0xff] %v692
      %702 = vst [vmem:[#allocation2 + $0x38] sm:$0xff] %v693
      %703 = vst [vmem:[#allocation2 + $0x40] sm:$0xff] %v694
      %v704 = vld [vmem:[%s165 + $0x4] sm:$0xe]
      %v705 = vld [vmem:[%s165 + $0x8] sm:$0xf]
      %v706 = vld [vmem:[%s165 + $0xc] sm:$0xf]
      %v707 = vld [vmem:[%s165 + $0x10] sm:$0xf]
      %v708 = vld [vmem:[%s165 + $0x14] sm:$0xf]
      %v709 = vld [vmem:[%s165 + $0x18] sm:$0xf]
      %v710 = vld [vmem:[%s165 + $0x1c] sm:$0xf]
      %v711 = vld [vmem:[%s165 + $0x20] sm:$0xf]
      %v712 = vld [vmem:[%s165 + $0x24] sm:$0xf]
      %v713 = vld [vmem:[%s165 + $0x28] sm:$0x1]
      %s714 = scalar_lea.vmem %s1, 24
      %v715 = vld [vmem:[%s714] sm:$0xf]
      %v716 = vld [vmem:[%s714 + $0x4] sm:$0xf]
      %v727 = vunpack.c.l.b16 %v704
      %v728 = vunpack.c.l.b16 %v705
      %v729 = vunpack.c.l.b16 %v706
      %v730 = vunpack.c.l.b16 %v707
      %v731 = vunpack.c.l.b16 %v708
      %v732 = vunpack.c.l.b16 %v709
      %v733 = vunpack.c.l.b16 %v710
      %v734 = vunpack.c.l.b16 %v711
      %v735 = vunpack.c.l.b16 %v712
      %v736 = vunpack.c.l.b16 %v713
      %v737 = vpack.c.b16 %v728, %v727
      %v738 = vpack.c.b16 %v730, %v729
      %v739 = vpack.c.b16 %v732, %v731
      %v740 = vpack.c.b16 %v734, %v733
      %v741 = vpack.c.b16 %v736, %v735
      %vm742 = vcmask 1046528
      %v743 = vrot.slane %v737, 1
      %v744 = vrot.slane %v738, 1
      %v745 = vsel %vm742, %v743, %v744
      %v746 = vrot.slane %v739, 1
      %v747 = vsel %vm742, %v744, %v746
      %v748 = vrot.slane %v740, 1
      %v749 = vsel %vm742, %v746, %v748
      %v750 = vrot.slane %v741, 1
      %v751 = vsel %vm742, %v748, %v750
      %v754 = vunpack.c.l.b16 %v715
      %v755 = vunpack.c.l.b16 %v716
      %v756 = vpack.c.b16 %v755, %v754
      %v759 = vsel %vm212, %v745, 0
      %v762 = vsel %vm212, %v747, 0
      %v765 = vsel %vm212, %v749, 0
      %v768 = vsel %vm212, %v751, 0
      %v771 = vsel %vm212, %v750, 0
      %773 = vmatprep.subr.bf16.mxu0 0
      %774 = vmatpush1.bf16.msra.mxu0 0
      %775 = vmatprep.subr.bf16.mxu0 0
      %776 = vmatpush1.bf16.msra.mxu0 0
      %777 = vmatprep.subr.bf16.mxu0 0
      %778 = vmatpush1.bf16.msra.mxu0 0
      %779 = vmatprep.subr.bf16.mxu0 0
      %780 = vmatpush1.bf16.msra.mxu0 0
      %781 = vmatprep.subr.bf16.mxu0 0
      %782 = vmatpush1.bf16.msra.mxu0 0
      %783 = vmatprep.subr.bf16.mxu0 0
      %784 = vmatpush1.bf16.msra.mxu0 0
      %785 = vmatprep.subr.bf16.mxu0 0
      %786 = vmatpush1.bf16.msra.mxu0 0
      %787 = vmatprep.subr.bf16.mxu0 0
      %788 = vmatpush1.bf16.msra.mxu0 %v756
      %789 = vmatprep.subr.bf16.mxu0 0
      %790 = vmatpush2.bf16.msra.mxu0 0
      %791 = vmatprep.subr.bf16.mxu0 0
      %792 = vmatpush2.bf16.msra.mxu0 0
      %793 = vmatprep.subr.bf16.mxu0 0
      %794 = vmatpush2.bf16.msra.mxu0 0
      %795 = vmatprep.subr.bf16.mxu0 0
      %796 = vmatpush2.bf16.msra.mxu0 0
      %797 = vmatprep.subr.bf16.mxu0 0
      %798 = vmatpush2.bf16.msra.mxu0 0
      %799 = vmatprep.subr.bf16.mxu0 0
      %800 = vmatpush2.bf16.msra.mxu0 0
      %801 = vmatprep.subr.bf16.mxu0 0
      %802 = vmatpush2.bf16.msra.mxu0 0
      %803 = vmatprep.subr.bf16.mxu0 0
      %804 = vmatpush2.bf16.msra.mxu0 0
      %805 = vmatprep.mubr.bf16.mxu0 0
      %806 = vmatmul.mubr.bf16.gmra.mxu0 %v759
      %v807 = vpop.f32.mrf.mxu0
      %v808 = vadd.f32 0.0, %v807
      %v809 = vpop.f32.mrf.mxu0
      %v810 = vpop.f32.mrf.mxu0
      %v811 = vadd.f32 0.0, %v810
      %v812 = vpop.f32.mrf.mxu0
      %813 = vmatprep.mubr.bf16.mxu0 0
      %814 = vmatmul.mubr.bf16.gmra.mxu0 %v762
      %v815 = vpop.f32.mrf.mxu0
      %v816 = vadd.f32 0.0, %v815
      %v817 = vpop.f32.mrf.mxu0
      %v818 = vpop.f32.mrf.mxu0
      %v819 = vadd.f32 0.0, %v818
      %v820 = vpop.f32.mrf.mxu0
      %821 = vmatprep.mubr.bf16.mxu0 0
      %822 = vmatmul.mubr.bf16.gmra.mxu0 %v765
      %v823 = vpop.f32.mrf.mxu0
      %v824 = vadd.f32 0.0, %v823
      %v825 = vpop.f32.mrf.mxu0
      %v826 = vpop.f32.mrf.mxu0
      %v827 = vadd.f32 0.0, %v826
      %v828 = vpop.f32.mrf.mxu0
      %829 = vmatprep.mubr.bf16.mxu0 0
      %830 = vmatmul.mubr.bf16.gmra.mxu0 %v768
      %v831 = vpop.f32.mrf.mxu0
      %v832 = vadd.f32 0.0, %v831
      %v833 = vpop.f32.mrf.mxu0
      %v834 = vpop.f32.mrf.mxu0
      %v835 = vadd.f32 0.0, %v834
      %v836 = vpop.f32.mrf.mxu0
      %837 = vmatprep.mubr.bf16.mxu0 0
      %838 = vmatmul.mubr.bf16.gmra.mxu0 %v771
      %v839 = vpop.f32.mrf.mxu0
      %v840 = vadd.f32 0.0, %v839
      %v841 = vpop.f32.mrf.mxu0
      %v842 = vpop.f32.mrf.mxu0
      %v843 = vpop.f32.mrf.mxu0
      %844 = vdwg.mxu0
      %v845 = vld [vmem:[#allocation2] sm:$0xff]
      %v846 = vld [vmem:[#allocation2 + $0x8] sm:$0xff]
      %v847 = vld [vmem:[#allocation2 + $0x10] sm:$0xff]
      %v848 = vld [vmem:[#allocation2 + $0x18] sm:$0xff]
      %v849 = vld [vmem:[#allocation2 + $0x20] sm:$0xff]
      %v850 = vld [vmem:[#allocation2 + $0x28] sm:$0xff]
      %v851 = vld [vmem:[#allocation2 + $0x30] sm:$0xff]
      %v852 = vld [vmem:[#allocation2 + $0x38] sm:$0xff]
      %v853 = vld [vmem:[#allocation2 + $0x40] sm:$0xff]
      %v854 = vadd.f32 %v845, %v808
      %v855 = vadd.f32 %v846, %v811
      %v856 = vadd.f32 %v847, %v816
      %v857 = vadd.f32 %v848, %v819
      %v858 = vadd.f32 %v849, %v824
      %v859 = vadd.f32 %v850, %v827
      %v860 = vadd.f32 %v851, %v832
      %v861 = vadd.f32 %v852, %v835
      %v862 = vadd.f32 %v853, %v840
      %863 = vst [vmem:[#allocation2] sm:$0xff] %v854
      %864 = vst [vmem:[#allocation2 + $0x8] sm:$0xff] %v855
      %865 = vst [vmem:[#allocation2 + $0x10] sm:$0xff] %v856
      %866 = vst [vmem:[#allocation2 + $0x18] sm:$0xff] %v857
      %867 = vst [vmem:[#allocation2 + $0x20] sm:$0xff] %v858
      %868 = vst [vmem:[#allocation2 + $0x28] sm:$0xff] %v859
      %869 = vst [vmem:[#allocation2 + $0x30] sm:$0xff] %v860
      %870 = vst [vmem:[#allocation2 + $0x38] sm:$0xff] %v861
      %871 = vst [vmem:[#allocation2 + $0x40] sm:$0xff] %v862
      %v872 = vld [vmem:[#allocation2] sm:$0xff]
      %v873 = vld [vmem:[#allocation2 + $0x8] sm:$0xff]
      %v874 = vld [vmem:[#allocation2 + $0x10] sm:$0xff]
      %v875 = vld [vmem:[#allocation2 + $0x18] sm:$0xff]
      %v876 = vld [vmem:[#allocation2 + $0x20] sm:$0xff]
      %v877 = vld [vmem:[#allocation2 + $0x28] sm:$0xff]
      %v878 = vld [vmem:[#allocation2 + $0x30] sm:$0xff]
      %v879 = vld [vmem:[#allocation2 + $0x38] sm:$0xff]
      %v880 = vld [vmem:[#allocation2 + $0x40] sm:$0xff]
      %v881 = vld [vmem:[%s2] sm:$0xff]
      %v882 = vld [vmem:[%s2 + $0x8] sm:$0xff]
      %v883 = vld [vmem:[%s2 + $0x10] sm:$0xff]
      %v884 = vld [vmem:[%s2 + $0x18] sm:$0xff]
      %v885 = vld [vmem:[%s2 + $0x20] sm:$0xff]
      %v886 = vld [vmem:[%s2 + $0x28] sm:$0xff]
      %v887 = vld [vmem:[%s2 + $0x30] sm:$0xff]
      %v888 = vld [vmem:[%s2 + $0x38] sm:$0xff]
      %v889 = vld [vmem:[%s2 + $0x40] sm:$0xff]
      %891 = vset.pattern.permute.xlu0 0
      %892 = vperm.xlu0 %891, %v881
      %v893 = vpop.permute.xlu0 %892
      %896 = vset.pattern.permute.xlu0 0
      %897 = vperm.xlu0 %896, %v882
      %v898 = vpop.permute.xlu0 %897
      %901 = vset.pattern.permute.xlu0 0
      %902 = vperm.xlu0 %901, %v883
      %v903 = vpop.permute.xlu0 %902
      %906 = vset.pattern.permute.xlu0 0
      %907 = vperm.xlu0 %906, %v884
      %v908 = vpop.permute.xlu0 %907
      %911 = vset.pattern.permute.xlu0 0
      %912 = vperm.xlu0 %911, %v885
      %v913 = vpop.permute.xlu0 %912
      %916 = vset.pattern.permute.xlu0 0
      %917 = vperm.xlu0 %916, %v886
      %v918 = vpop.permute.xlu0 %917
      %921 = vset.pattern.permute.xlu0 0
      %922 = vperm.xlu0 %921, %v887
      %v923 = vpop.permute.xlu0 %922
      %926 = vset.pattern.permute.xlu0 0
      %927 = vperm.xlu0 %926, %v888
      %v928 = vpop.permute.xlu0 %927
      %931 = vset.pattern.permute.xlu0 0
      %932 = vperm.xlu0 %931, %v889
      %v933 = vpop.permute.xlu0 %932
      %v935 = vmul.f32 %v872, %v893
      %v936 = vmul.f32 %v873, %v898
      %v937 = vmul.f32 %v874, %v903
      %v938 = vmul.f32 %v875, %v908
      %v939 = vmul.f32 %v876, %v913
      %v940 = vmul.f32 %v877, %v918
      %v941 = vmul.f32 %v878, %v923
      %v942 = vmul.f32 %v879, %v928
      %v943 = vmul.f32 %v880, %v933
      %v944 = vadd.f32 %v935, %v936
      %v945 = vadd.f32 %v944, %v937
      %v946 = vadd.f32 %v945, %v938
      %v947 = vadd.f32 %v946, %v939
      %v948 = vadd.f32 %v947, %v940
      %v949 = vadd.f32 %v948, %v941
      %v950 = vadd.f32 %v949, %v942
      %v951 = vadd.f32 %v950, %v943
      %v952 = vrot.slane %v951, 4
      %v953 = vadd.f32 %v951, %v952
      %v954 = vrot.slane %v953, 2
      %v955 = vadd.f32 %v953, %v954
      %v956 = vrot.slane %v955, 1
      %v957 = vadd.f32 %v955, %v956
      %v958 = vmul.f32 %v957, 0.015625
      %v959 = vmul.f32 %v935, %v872
      %v960 = vmul.f32 %v936, %v873
      %v961 = vmul.f32 %v937, %v874
      %v962 = vmul.f32 %v938, %v875
      %v963 = vmul.f32 %v939, %v876
      %v964 = vmul.f32 %v940, %v877
      %v965 = vmul.f32 %v941, %v878
      %v966 = vmul.f32 %v942, %v879
      %v967 = vmul.f32 %v943, %v880
      %v968 = vadd.f32 %v959, %v960
      %v969 = vadd.f32 %v968, %v961
      %v970 = vadd.f32 %v969, %v962
      %v971 = vadd.f32 %v970, %v963
      %v972 = vadd.f32 %v971, %v964
      %v973 = vadd.f32 %v972, %v965
      %v974 = vadd.f32 %v973, %v966
      %v975 = vadd.f32 %v974, %v967
      %v976 = vrot.slane %v975, 4
      %v977 = vadd.f32 %v975, %v976
      %v978 = vrot.slane %v977, 2
      %v979 = vadd.f32 %v977, %v978
      %v980 = vrot.slane %v979, 1
      %v981 = vadd.f32 %v979, %v980
      %v982 = vmul.f32 %v981, 0.015625
      %v983 = vmul.f32 %v958, %v958
      %v984 = vsub.f32 %v982, %v983
      %v985 = vmax.f32 %v984, 0.0
      %v986 = vsub.f32 %v872, %v958
      %v987 = vsub.f32 %v873, %v958
      %v988 = vsub.f32 %v874, %v958
      %v989 = vsub.f32 %v875, %v958
      %v990 = vsub.f32 %v876, %v958
      %v991 = vsub.f32 %v877, %v958
      %v992 = vsub.f32 %v878, %v958
      %v993 = vsub.f32 %v879, %v958
      %v994 = vsub.f32 %v880, %v958
      %v995 = vadd.f32 %v985, 1e-05
      %v996 = vrsqrt.pop %v995
      %v997 = vmul.f32 %v986, %v996
      %v998 = vmul.f32 %v987, %v996
      %v999 = vmul.f32 %v988, %v996
      %v1000 = vmul.f32 %v989, %v996
      %v1001 = vmul.f32 %v990, %v996
      %v1002 = vmul.f32 %v991, %v996
      %v1003 = vmul.f32 %v992, %v996
      %v1004 = vmul.f32 %v993, %v996
      %v1005 = vmul.f32 %v994, %v996
      %vm1006 = vcmp.ge.f32.partialorder %v997, 0.0
      %vm1007 = vcmp.ge.f32.partialorder %v998, 0.0
      %vm1008 = vcmp.ge.f32.partialorder %v999, 0.0
      %vm1009 = vcmp.ge.f32.partialorder %v1000, 0.0
      %vm1010 = vcmp.ge.f32.partialorder %v1001, 0.0
      %vm1011 = vcmp.ge.f32.partialorder %v1002, 0.0
      %vm1012 = vcmp.ge.f32.partialorder %v1003, 0.0
      %vm1013 = vcmp.ge.f32.partialorder %v1004, 0.0
      %vm1014 = vcmp.ge.f32.partialorder %v1005, 0.0
      %v1015 = vmul.f32 %v997, 0.2
      %v1016 = vmul.f32 %v998, 0.2
      %v1017 = vmul.f32 %v999, 0.2
      %v1018 = vmul.f32 %v1000, 0.2
      %v1019 = vmul.f32 %v1001, 0.2
      %v1020 = vmul.f32 %v1002, 0.2
      %v1021 = vmul.f32 %v1003, 0.2
      %v1022 = vmul.f32 %v1004, 0.2
      %v1023 = vmul.f32 %v1005, 0.2
      %v1024 = vsel %vm1006, %v997, %v1015
      %v1025 = vsel %vm1007, %v998, %v1016
      %v1026 = vsel %vm1008, %v999, %v1017
      %v1027 = vsel %vm1009, %v1000, %v1018
      %v1028 = vsel %vm1010, %v1001, %v1019
      %v1029 = vsel %vm1011, %v1002, %v1020
      %v1030 = vsel %vm1012, %v1003, %v1021
      %v1031 = vsel %vm1013, %v1004, %v1022
      %v1032 = vsel %vm1014, %v1005, %v1023
      %v1033 = vpack.c.bf16 %v1025, %v1024
      %v1034 = vpack.c.bf16 %v1027, %v1026
      %v1035 = vpack.c.bf16 %v1029, %v1028
      %v1036 = vpack.c.bf16 %v1031, %v1030
      %v1037 = vpack.c.bf16 %v1032, %v1032
      %v1043 = vunpack.c.l.b16 %v1033
      %v1044 = vunpack.c.h.b16 %v1033
      %v1045 = vunpack.c.l.b16 %v1034
      %v1046 = vunpack.c.h.b16 %v1034
      %v1047 = vunpack.c.l.b16 %v1035
      %v1048 = vunpack.c.h.b16 %v1035
      %v1049 = vunpack.c.l.b16 %v1036
      %v1050 = vunpack.c.h.b16 %v1036
      %v1051 = vunpack.c.l.b16 %v1037
      %v1052 = vpack.c.b16 %v1043, %v1043
      %v1053 = vpack.c.b16 %v1044, %v1044
      %v1054 = vpack.c.b16 %v1045, %v1045
      %v1055 = vpack.c.b16 %v1046, %v1046
      %v1056 = vpack.c.b16 %v1047, %v1047
      %v1057 = vpack.c.b16 %v1048, %v1048
      %v1058 = vpack.c.b16 %v1049, %v1049
      %v1059 = vpack.c.b16 %v1050, %v1050
      %v1060 = vpack.c.b16 %v1051, %v1051
      %1070 = vst [vmem:[%s170] sm:$0xf] %v1052
      %1071 = vst [vmem:[%s170 + $0x4] sm:$0xf] %v1053
      %1072 = vst [vmem:[%s170 + $0x8] sm:$0xf] %v1054
      %1073 = vst [vmem:[%s170 + $0xc] sm:$0xf] %v1055
      %1074 = vst [vmem:[%s170 + $0x10] sm:$0xf] %v1056
      %1075 = vst [vmem:[%s170 + $0x14] sm:$0xf] %v1057
      %1076 = vst [vmem:[%s170 + $0x18] sm:$0xf] %v1058
      %1077 = vst [vmem:[%s170 + $0x1c] sm:$0xf] %v1059
      %1078 = vst [vmem:[%s170 + $0x20] sm:$0xf] %v1060
      %p1079 = scmp.lt.s32.totalorder %s14, 1
      %s1080 = scalar_select %p1079, %s14, 1
      %s1081 = smul.addr %s1080, 9
      %s1082 = smul.addr %s1081, 4
      %s1083 = scalar_lea.vmem %s3, %s1082
      // Predicated region
      $region33: #{conv_block_forward.1} parent=31 // pred_check
        %p1084 = pneg %p100
      $region34: #{conv_block_forward.1} parent=31 // pred_check_branch
        %1086 = sbr.rel (%p1084) target = $region36
      $region35: #{conv_block_forward.1} parent=31 // pred_region
        _
      $region36: #{conv_block_forward.1} parent=31 // pred_fallthru
        _
    $region32: #{conv_block_forward.1} parent=5 // pred_fallthru
      _
    %p1087 = scmp.le.s32.totalorder 2, %s9
    // Predicated region
    $region37: #{conv_block_forward.1} parent=5 // pred_check
      %p1088 = pneg %p1087
    $region38: #{conv_block_forward.1} parent=5 // pred_check_branch
      %1090 = sbr.rel (%p1088) target = $region40
    $region39: #{conv_block_forward.1} parent=5 // pred_region
      %s1091 = ssub.s32 %s9, 2
      // Predicated region
      $region41: #{conv_block_forward.1} parent=39 // pred_check
        %p1092 = pneg %p106
      $region42: #{conv_block_forward.1} parent=39 // pred_check_branch
        %1094 = sbr.rel (%p1092) target = $region44
      $region43: #{conv_block_forward.1} parent=39 // pred_region
        %p1095 = scmp.lt.s32.totalorder %s15, 1
        %s1096 = scalar_select %p1095, %s15, 1
        %s1097 = smul.addr %s1096, 9
        %s1098 = smul.addr %s1097, 4
        %s1099 = scalar_lea.vmem %s3, %s1098
      $region44: #{conv_block_forward.1} parent=39 // pred_fallthru
        _
    $region40: #{conv_block_forward.1} parent=5 // pred_fallthru
      _
  $region6: #{conv_block_forward.1} parent=0 // loop_footer
    %s13 = sadd.s32 1, %s9
  $region7: #{conv_block_forward.1} parent=0 // loop_footer_branch
    %8 = sbr.rel target = $region3
  $region8: #{conv_block_forward.1} parent=0 // loop_exit
    _

</llo_original>
